<compile_context>
chip_gen: v5e
topology: v5e:2x2
jax: 0.10.0
libtpu: 0.0.40
codegen_flags: <defaults>
</compile_context>

<pallas_src>
import jax
import jax.numpy as jnp
from jax.experimental import pallas as pl
from jax.experimental.pallas import tpu as pltpu


def _mac_small_k(x, w, b):
    """y = x @ w + b as an unrolled VPU multiply-accumulate over tiny K.

    x: (B, K), w: (K, N), b: (1, N).  For K<=4 this avoids an MXU push/pop
    round-trip on the strictly serial dependency chain; the K fmul/fadd pairs
    issue in the vector-ALU slots instead."""
    acc = b  # (1, N) broadcasts against (B, N)
    for k in range(x.shape[1]):
        acc = acc + x[:, k:k + 1] * w[k:k + 1, :]
    return acc


def vae_kernel(x_ref, eps_ref,
               w1_ref, b1_ref, w2_ref, b2_ref,
               wh_ref, bh_ref,
               wd1_ref, bd1_ref, wd2_ref, bd2_ref, wd3_ref, bd3_ref,
               out_ref):
    x = x_ref[...]          # (B, input_dim)
    eps = eps_ref[...]      # (B, latent_dim)
    latent_dim = eps.shape[1]

    # ---- encoder: Linear(3,16)+ReLU (VPU MAC), Linear(16,8)+ReLU (MXU) ----
    h = jnp.maximum(_mac_small_k(x, w1_ref[...], b1_ref[...]), 0.0)
    h = jnp.maximum(
        jnp.dot(h, w2_ref[...], preferred_element_type=jnp.float32) + b2_ref[...],
        0.0)

    # ---- fused latent heads: one matmul for [mu | logvar] ----
    heads = (jnp.dot(h, wh_ref[...], preferred_element_type=jnp.float32)
             + bh_ref[...])
    mu = heads[:, :latent_dim]
    logvar = heads[:, latent_dim:]

    # ---- reparameterization trick: z = mu + eps * exp(0.5 * logvar) ----
    z = mu + eps * jnp.exp(0.5 * logvar)

    # ---- decoder: Linear(3,8)+ReLU (VPU MAC), Linear(8,16)+ReLU, Linear(16,3) ----
    d = jnp.maximum(_mac_small_k(z, wd1_ref[...], bd1_ref[...]), 0.0)
    d = jnp.maximum(
        jnp.dot(d, wd2_ref[...], preferred_element_type=jnp.float32) + bd2_ref[...],
        0.0)
    recon = (jnp.dot(d, wd3_ref[...], preferred_element_type=jnp.float32)
             + bd3_ref[...])

    # ---- single lane-packed output slab: [recon | mu | logvar] ----
    out_ref[...] = jnp.concatenate([recon, mu, logvar], axis=1)


def init_linear(key, fan_in, fan_out):
    """PyTorch-style nn.Linear init (uniform +-1/sqrt(fan_in)).

    Returns W of shape (fan_in, fan_out) (pre-transposed) and b of shape
    (1, fan_out)."""
    kw, kb = jax.random.split(key)
    bound = 1.0 / jnp.sqrt(jnp.asarray(fan_in, jnp.float32))
    w = jax.random.uniform(kw, (fan_in, fan_out), jnp.float32, -bound, bound)
    b = jax.random.uniform(kb, (1, fan_out), jnp.float32, -bound, bound)
    return w, b


def make_vae_params(input_dim=3, latent_dim=3, seed=42):
    """PyTorch-equivalent (unfused) parameter set."""
    keys = jax.random.split(jax.random.PRNGKey(seed), 7)
    w1, b1 = init_linear(keys[0], input_dim, 16)
    w2, b2 = init_linear(keys[1], 16, 8)
    wmu, bmu = init_linear(keys[2], 8, latent_dim)
    wlv, blv = init_linear(keys[3], 8, latent_dim)
    wd1, bd1 = init_linear(keys[4], latent_dim, 8)
    wd2, bd2 = init_linear(keys[5], 8, 16)
    wd3, bd3 = init_linear(keys[6], 16, input_dim)
    return (w1, b1, w2, b2, wmu, bmu, wlv, blv,
            wd1, bd1, wd2, bd2, wd3, bd3)


def prepare_kernel_params(params):
    """Fuse mu/logvar heads into a single (8, 2*latent_dim) weight + bias."""
    (w1, b1, w2, b2, wmu, bmu, wlv, blv,
     wd1, bd1, wd2, bd2, wd3, bd3) = params
    wh = jnp.concatenate([wmu, wlv], axis=1)
    bh = jnp.concatenate([bmu, blv], axis=1)
    return (w1, b1, w2, b2, wh, bh, wd1, bd1, wd2, bd2, wd3, bd3)


def vae_forward(x, eps, kernel_params):
    """Full VAE forward pass in a single Pallas kernel invocation.

    x:   (batch, input_dim) float32
    eps: (batch, latent_dim) float32 standard-normal noise
    kernel_params: output of prepare_kernel_params
    Returns (recon, mu, logvar)."""
    batch, input_dim = x.shape
    latent_dim = eps.shape[1]

    all_inputs = (x, eps) + tuple(kernel_params)
    # Whole-array blocks (no grid): every operand is tiny and lives in VMEM.
    vmem_spec = pl.BlockSpec(memory_space=pltpu.MemorySpace.VMEM)

    packed = pl.pallas_call(
        vae_kernel,
        out_shape=jax.ShapeDtypeStruct(
            (batch, input_dim + 2 * latent_dim), jnp.float32),
        in_specs=[vmem_spec] * len(all_inputs),
        out_specs=vmem_spec,
    )(*all_inputs)

    recon = packed[:, :input_dim]
    mu = packed[:, input_dim:input_dim + latent_dim]
    logvar = packed[:, input_dim + latent_dim:]
    return recon, mu, logvar


def vae_forward_ref(x, eps, params):
    """Pure-JAX reference (unfused PyTorch-equivalent params)."""
    (w1, b1, w2, b2, wmu, bmu, wlv, blv,
     wd1, bd1, wd2, bd2, wd3, bd3) = params
    h = jnp.maximum(x @ w1 + b1, 0.0)
    h = jnp.maximum(h @ w2 + b2, 0.0)
    mu = h @ wmu + bmu
    logvar = h @ wlv + blv
    z = mu + eps * jnp.exp(0.5 * logvar)
    d = jnp.maximum(z @ wd1 + bd1, 0.0)
    d = jnp.maximum(d @ wd2 + bd2, 0.0)
    recon = d @ wd3 + bd3
    return recon, mu, logvar


if __name__ == "__main__":
    input_dim = 3
    latent_dim = 3
    batch = 8

    key = jax.random.PRNGKey(0)
    kx, keps = jax.random.split(key)
    x = jax.random.normal(kx, (batch, input_dim), dtype=jnp.float32)
    eps = jax.random.normal(keps, (batch, latent_dim), dtype=jnp.float32)

    params = make_vae_params(input_dim=input_dim, latent_dim=latent_dim, seed=42)
    kparams = prepare_kernel_params(params)

    recon, mu, logvar = vae_forward(x, eps, kparams)
    jax.block_until_ready((recon, mu, logvar))

    # sanity-check against pure-JAX reference
    recon_r, mu_r, logvar_r = vae_forward_ref(x, eps, params)
    assert jnp.allclose(recon, recon_r, atol=1e-5, rtol=1e-5)
    assert jnp.allclose(mu, mu_r, atol=1e-5, rtol=1e-5)
    assert jnp.allclose(logvar, logvar_r, atol=1e-5, rtol=1e-5)
    assert recon.shape == (batch, input_dim)
    assert mu.shape == (batch, latent_dim)
    assert logvar.shape == (batch, latent_dim)

    print("KERNEL_OK")
</pallas_src>

<mosaic_0001>
module attributes {stable_mosaic.version = 11 : i64} {
  func.func @vae_kernel(%arg0: memref<8x3xf32, #tpu.memory_space<vmem>>, %arg1: memref<8x3xf32, #tpu.memory_space<vmem>>, %arg2: memref<3x16xf32, #tpu.memory_space<vmem>>, %arg3: memref<1x16xf32, #tpu.memory_space<vmem>>, %arg4: memref<16x8xf32, #tpu.memory_space<vmem>>, %arg5: memref<1x8xf32, #tpu.memory_space<vmem>>, %arg6: memref<8x6xf32, #tpu.memory_space<vmem>>, %arg7: memref<1x6xf32, #tpu.memory_space<vmem>>, %arg8: memref<3x8xf32, #tpu.memory_space<vmem>>, %arg9: memref<1x8xf32, #tpu.memory_space<vmem>>, %arg10: memref<8x16xf32, #tpu.memory_space<vmem>>, %arg11: memref<1x16xf32, #tpu.memory_space<vmem>>, %arg12: memref<16x3xf32, #tpu.memory_space<vmem>>, %arg13: memref<1x3xf32, #tpu.memory_space<vmem>>, %arg14: memref<8x9xf32, #tpu.memory_space<vmem>>) attributes {dimension_semantics = [], scalar_prefetch = 0 : i64, scratch_operands = 0 : i64, tpu.core_type = #tpu.core_type<tc>} {
    %c0 = arith.constant 0 : index
    %c0_0 = arith.constant 0 : index
    %0 = vector.load %arg0[%c0, %c0_0] : memref<8x3xf32, #tpu.memory_space<vmem>>, vector<8x3xf32>
    %c0_1 = arith.constant 0 : index
    %c0_2 = arith.constant 0 : index
    %1 = vector.load %arg1[%c0_1, %c0_2] : memref<8x3xf32, #tpu.memory_space<vmem>>, vector<8x3xf32>
    %c0_3 = arith.constant 0 : index
    %c0_4 = arith.constant 0 : index
    %2 = vector.load %arg2[%c0_3, %c0_4] : memref<3x16xf32, #tpu.memory_space<vmem>>, vector<3x16xf32>
    %c0_5 = arith.constant 0 : index
    %c0_6 = arith.constant 0 : index
    %3 = vector.load %arg3[%c0_5, %c0_6] : memref<1x16xf32, #tpu.memory_space<vmem>>, vector<1x16xf32>
    %4 = vector.extract_strided_slice %0 {offsets = [0, 0], sizes = [8, 1], strides = [1, 1]} : vector<8x3xf32> to vector<8x1xf32>
    %5 = vector.extract_strided_slice %2 {offsets = [0, 0], sizes = [1, 16], strides = [1, 1]} : vector<3x16xf32> to vector<1x16xf32>
    %6 = vector.broadcast %4 : vector<8x1xf32> to vector<8x16xf32>
    %7 = vector.broadcast %5 : vector<1x16xf32> to vector<8x16xf32>
    %8 = arith.mulf %6, %7 : vector<8x16xf32>
    %9 = vector.broadcast %3 : vector<1x16xf32> to vector<8x16xf32>
    %10 = arith.addf %9, %8 : vector<8x16xf32>
    %11 = vector.extract_strided_slice %0 {offsets = [0, 1], sizes = [8, 1], strides = [1, 1]} : vector<8x3xf32> to vector<8x1xf32>
    %12 = vector.extract_strided_slice %2 {offsets = [1, 0], sizes = [1, 16], strides = [1, 1]} : vector<3x16xf32> to vector<1x16xf32>
    %13 = vector.broadcast %11 : vector<8x1xf32> to vector<8x16xf32>
    %14 = vector.broadcast %12 : vector<1x16xf32> to vector<8x16xf32>
    %15 = arith.mulf %13, %14 : vector<8x16xf32>
    %16 = arith.addf %10, %15 : vector<8x16xf32>
    %17 = vector.extract_strided_slice %0 {offsets = [0, 2], sizes = [8, 1], strides = [1, 1]} : vector<8x3xf32> to vector<8x1xf32>
    %18 = vector.extract_strided_slice %2 {offsets = [2, 0], sizes = [1, 16], strides = [1, 1]} : vector<3x16xf32> to vector<1x16xf32>
    %19 = vector.broadcast %17 : vector<8x1xf32> to vector<8x16xf32>
    %20 = vector.broadcast %18 : vector<1x16xf32> to vector<8x16xf32>
    %21 = arith.mulf %19, %20 : vector<8x16xf32>
    %22 = arith.addf %16, %21 : vector<8x16xf32>
    %cst = arith.constant 0.000000e+00 : f32
    %23 = vector.broadcast %cst : f32 to vector<8x16xf32>
    %24 = arith.maximumf %22, %23 : vector<8x16xf32>
    %c0_7 = arith.constant 0 : index
    %c0_8 = arith.constant 0 : index
    %25 = vector.load %arg4[%c0_7, %c0_8] : memref<16x8xf32, #tpu.memory_space<vmem>>, vector<16x8xf32>
    %cst_9 = arith.constant dense<0.000000e+00> : vector<8x8xf32>
    %26 = tpu.matmul %24, %25, %cst_9 {dimension_numbers = #tpu.dot_dimension_numbers<[1], [0], [0], [1], [0, 0, 1, 1], [], []>} : vector<8x16xf32>, vector<16x8xf32>, vector<8x8xf32> -> vector<8x8xf32>
    %c0_10 = arith.constant 0 : index
    %c0_11 = arith.constant 0 : index
    %27 = vector.load %arg5[%c0_10, %c0_11] : memref<1x8xf32, #tpu.memory_space<vmem>>, vector<1x8xf32>
    %28 = vector.broadcast %27 : vector<1x8xf32> to vector<8x8xf32>
    %29 = arith.addf %26, %28 : vector<8x8xf32>
    %cst_12 = arith.constant 0.000000e+00 : f32
    %30 = vector.broadcast %cst_12 : f32 to vector<8x8xf32>
    %31 = arith.maximumf %29, %30 : vector<8x8xf32>
    %c0_13 = arith.constant 0 : index
    %c0_14 = arith.constant 0 : index
    %32 = vector.load %arg6[%c0_13, %c0_14] : memref<8x6xf32, #tpu.memory_space<vmem>>, vector<8x6xf32>
    %cst_15 = arith.constant dense<0.000000e+00> : vector<8x6xf32>
    %33 = tpu.matmul %31, %32, %cst_15 {dimension_numbers = #tpu.dot_dimension_numbers<[1], [0], [0], [1], [0, 0, 1, 1], [], []>} : vector<8x8xf32>, vector<8x6xf32>, vector<8x6xf32> -> vector<8x6xf32>
    %c0_16 = arith.constant 0 : index
    %c0_17 = arith.constant 0 : index
    %34 = vector.load %arg7[%c0_16, %c0_17] : memref<1x6xf32, #tpu.memory_space<vmem>>, vector<1x6xf32>
    %35 = vector.broadcast %34 : vector<1x6xf32> to vector<8x6xf32>
    %36 = arith.addf %33, %35 : vector<8x6xf32>
    %37 = vector.extract_strided_slice %36 {offsets = [0, 0], sizes = [8, 3], strides = [1, 1]} : vector<8x6xf32> to vector<8x3xf32>
    %38 = vector.extract_strided_slice %36 {offsets = [0, 3], sizes = [8, 3], strides = [1, 1]} : vector<8x6xf32> to vector<8x3xf32>
    %cst_18 = arith.constant 5.000000e-01 : f32
    %39 = vector.broadcast %cst_18 : f32 to vector<8x3xf32>
    %40 = arith.mulf %39, %38 : vector<8x3xf32>
    %41 = math.exp %40 : vector<8x3xf32>
    %42 = arith.mulf %1, %41 : vector<8x3xf32>
    %43 = arith.addf %37, %42 : vector<8x3xf32>
    %c0_19 = arith.constant 0 : index
    %c0_20 = arith.constant 0 : index
    %44 = vector.load %arg8[%c0_19, %c0_20] : memref<3x8xf32, #tpu.memory_space<vmem>>, vector<3x8xf32>
    %c0_21 = arith.constant 0 : index
    %c0_22 = arith.constant 0 : index
    %45 = vector.load %arg9[%c0_21, %c0_22] : memref<1x8xf32, #tpu.memory_space<vmem>>, vector<1x8xf32>
    %46 = vector.extract_strided_slice %43 {offsets = [0, 0], sizes = [8, 1], strides = [1, 1]} : vector<8x3xf32> to vector<8x1xf32>
    %47 = vector.extract_strided_slice %44 {offsets = [0, 0], sizes = [1, 8], strides = [1, 1]} : vector<3x8xf32> to vector<1x8xf32>
    %48 = vector.broadcast %46 : vector<8x1xf32> to vector<8x8xf32>
    %49 = vector.broadcast %47 : vector<1x8xf32> to vector<8x8xf32>
    %50 = arith.mulf %48, %49 : vector<8x8xf32>
    %51 = vector.broadcast %45 : vector<1x8xf32> to vector<8x8xf32>
    %52 = arith.addf %51, %50 : vector<8x8xf32>
    %53 = vector.extract_strided_slice %43 {offsets = [0, 1], sizes = [8, 1], strides = [1, 1]} : vector<8x3xf32> to vector<8x1xf32>
    %54 = vector.extract_strided_slice %44 {offsets = [1, 0], sizes = [1, 8], strides = [1, 1]} : vector<3x8xf32> to vector<1x8xf32>
    %55 = vector.broadcast %53 : vector<8x1xf32> to vector<8x8xf32>
    %56 = vector.broadcast %54 : vector<1x8xf32> to vector<8x8xf32>
    %57 = arith.mulf %55, %56 : vector<8x8xf32>
    %58 = arith.addf %52, %57 : vector<8x8xf32>
    %59 = vector.extract_strided_slice %43 {offsets = [0, 2], sizes = [8, 1], strides = [1, 1]} : vector<8x3xf32> to vector<8x1xf32>
    %60 = vector.extract_strided_slice %44 {offsets = [2, 0], sizes = [1, 8], strides = [1, 1]} : vector<3x8xf32> to vector<1x8xf32>
    %61 = vector.broadcast %59 : vector<8x1xf32> to vector<8x8xf32>
    %62 = vector.broadcast %60 : vector<1x8xf32> to vector<8x8xf32>
    %63 = arith.mulf %61, %62 : vector<8x8xf32>
    %64 = arith.addf %58, %63 : vector<8x8xf32>
    %cst_23 = arith.constant 0.000000e+00 : f32
    %65 = vector.broadcast %cst_23 : f32 to vector<8x8xf32>
    %66 = arith.maximumf %64, %65 : vector<8x8xf32>
    %c0_24 = arith.constant 0 : index
    %c0_25 = arith.constant 0 : index
    %67 = vector.load %arg10[%c0_24, %c0_25] : memref<8x16xf32, #tpu.memory_space<vmem>>, vector<8x16xf32>
    %cst_26 = arith.constant dense<0.000000e+00> : vector<8x16xf32>
    %68 = tpu.matmul %66, %67, %cst_26 {dimension_numbers = #tpu.dot_dimension_numbers<[1], [0], [0], [1], [0, 0, 1, 1], [], []>} : vector<8x8xf32>, vector<8x16xf32>, vector<8x16xf32> -> vector<8x16xf32>
    %c0_27 = arith.constant 0 : index
    %c0_28 = arith.constant 0 : index
    %69 = vector.load %arg11[%c0_27, %c0_28] : memref<1x16xf32, #tpu.memory_space<vmem>>, vector<1x16xf32>
    %70 = vector.broadcast %69 : vector<1x16xf32> to vector<8x16xf32>
    %71 = arith.addf %68, %70 : vector<8x16xf32>
    %cst_29 = arith.constant 0.000000e+00 : f32
    %72 = vector.broadcast %cst_29 : f32 to vector<8x16xf32>
    %73 = arith.maximumf %71, %72 : vector<8x16xf32>
    %c0_30 = arith.constant 0 : index
    %c0_31 = arith.constant 0 : index
    %74 = vector.load %arg12[%c0_30, %c0_31] : memref<16x3xf32, #tpu.memory_space<vmem>>, vector<16x3xf32>
    %cst_32 = arith.constant dense<0.000000e+00> : vector<8x3xf32>
    %75 = tpu.matmul %73, %74, %cst_32 {dimension_numbers = #tpu.dot_dimension_numbers<[1], [0], [0], [1], [0, 0, 1, 1], [], []>} : vector<8x16xf32>, vector<16x3xf32>, vector<8x3xf32> -> vector<8x3xf32>
    %c0_33 = arith.constant 0 : index
    %c0_34 = arith.constant 0 : index
    %76 = vector.load %arg13[%c0_33, %c0_34] : memref<1x3xf32, #tpu.memory_space<vmem>>, vector<1x3xf32>
    %77 = vector.broadcast %76 : vector<1x3xf32> to vector<8x3xf32>
    %78 = arith.addf %75, %77 : vector<8x3xf32>
    %79 = tpu.concatenate %78, %37, %38 in 1 : vector<8x3xf32>, vector<8x3xf32>, vector<8x3xf32> -> vector<8x9xf32>
    %c0_35 = arith.constant 0 : index
    %c0_36 = arith.constant 0 : index
    %80 = vector.load %arg14[%c0_35, %c0_36] : memref<8x9xf32, #tpu.memory_space<vmem>>, vector<8x9xf32>
    tpu.vector_store %arg14[%c0_35, %c0_36], %79 {strides = array<i32>} : memref<8x9xf32, #tpu.memory_space<vmem>>, vector<8x9xf32>,
    return
  }
}

</mosaic_0001>

<llo_original>
// kernel: tpu_custom_call.1
$region0: #{tpu_custom_call.1}
  #allocation0 [shape = 'u32[]', space=smem, size = 0x4, offset = 0x4, fixed_abs, tag = 'smem constant byte address 0x4 - core index']
  #allocation1 [shape = 'u32[72,128]{1,0:T(1,128)}', space=vmem, size = 0x9000, scoped, tag = 'internal scratch']
  %s0 = inlined_call_operand.vmem [shape: f32[8,3], index: 0, kind: input, shape index: {}]
  %s1 = inlined_call_operand.vmem [shape: f32[8,3], index: 1, kind: input, shape index: {}]
  %s2 = inlined_call_operand.vmem [shape: f32[3,16], index: 2, kind: input, shape index: {}]
  %s3 = inlined_call_operand.vmem [shape: f32[1,16], index: 3, kind: input, shape index: {}]
  %s4 = inlined_call_operand.vmem [shape: f32[16,8], index: 4, kind: input, shape index: {}]
  %s5 = inlined_call_operand.vmem [shape: f32[1,8], index: 5, kind: input, shape index: {}]
  %s6 = inlined_call_operand.vmem [shape: f32[8,6], index: 6, kind: input, shape index: {}]
  %s7 = inlined_call_operand.vmem [shape: f32[1,6], index: 7, kind: input, shape index: {}]
  %s8 = inlined_call_operand.vmem [shape: f32[3,8], index: 8, kind: input, shape index: {}]
  %s9 = inlined_call_operand.vmem [shape: f32[1,8], index: 9, kind: input, shape index: {}]
  %s10 = inlined_call_operand.vmem [shape: f32[8,16], index: 10, kind: input, shape index: {}]
  %s11 = inlined_call_operand.vmem [shape: f32[1,16], index: 11, kind: input, shape index: {}]
  %s12 = inlined_call_operand.vmem [shape: f32[16,3], index: 12, kind: input, shape index: {}]
  %s13 = inlined_call_operand.vmem [shape: f32[1,3], index: 13, kind: input, shape index: {}]
  %s14 = inlined_call_operand.hbm [shape: f32[8,9], index: 14, kind: output, shape index: {}]
  %s15 = sld [smem:[#allocation0]]
  $region66: #{tpu_custom_call.1} parent=0
    _
  %s17 = ssub.s32 1, %s15
  %s18 = scalar_select 0, %s17, %s15
  $region1: #{tpu_custom_call.1} parent=0
    #allocation2 [shape = 'u8[4096]{0}', space=vmem, size = 0x1000, scoped, tag = 'output window, operand 0, single buffered']
    #allocation3 [shape = 's32[1]{0}', space=sflag, size = 0x4, scoped, tag = 'scoped memory for tpu_custom_call.1']
    %19 = vsyncpa [#allocation3], 0
    // Predicated region
    $region2: #{tpu_custom_call.1} parent=1 // pred_check
      _
    $region3: #{tpu_custom_call.1} parent=1 // pred_check_branch
      %21 = sbr.rel (0) target = $region5
    $region4: #{tpu_custom_call.1} parent=1 // pred_region
      _
    $region5: #{tpu_custom_call.1} parent=1 // pred_fallthru
      _
    // Predicated region
    $region6: #{tpu_custom_call.1} parent=1 // pred_check
      _
    $region7: #{tpu_custom_call.1} parent=1 // pred_check_branch
      %23 = sbr.rel (0) target = $region9
    $region8: #{tpu_custom_call.1} parent=1 // pred_region
      _
    $region9: #{tpu_custom_call.1} parent=1 // pred_fallthru
      _
    // Predicated region
    $region10: #{tpu_custom_call.1} parent=1 // pred_check
      _
    $region11: #{tpu_custom_call.1} parent=1 // pred_check_branch
      %25 = sbr.rel (0) target = $region13
    $region12: #{tpu_custom_call.1} parent=1 // pred_region
      _
    $region13: #{tpu_custom_call.1} parent=1 // pred_fallthru
      _
    // Predicated region
    $region14: #{tpu_custom_call.1} parent=1 // pred_check
      _
    $region15: #{tpu_custom_call.1} parent=1 // pred_check_branch
      %27 = sbr.rel (0) target = $region17
    $region16: #{tpu_custom_call.1} parent=1 // pred_region
      _
    $region17: #{tpu_custom_call.1} parent=1 // pred_fallthru
      _
    // Predicated region
    $region18: #{tpu_custom_call.1} parent=1 // pred_check
      _
    $region19: #{tpu_custom_call.1} parent=1 // pred_check_branch
      %29 = sbr.rel (0) target = $region21
    $region20: #{tpu_custom_call.1} parent=1 // pred_region
      _
    $region21: #{tpu_custom_call.1} parent=1 // pred_fallthru
      _
    // Predicated region
    $region22: #{tpu_custom_call.1} parent=1 // pred_check
      _
    $region23: #{tpu_custom_call.1} parent=1 // pred_check_branch
      %31 = sbr.rel (0) target = $region25
    $region24: #{tpu_custom_call.1} parent=1 // pred_region
      _
    $region25: #{tpu_custom_call.1} parent=1 // pred_fallthru
      _
    // Predicated region
    $region26: #{tpu_custom_call.1} parent=1 // pred_check
      _
    $region27: #{tpu_custom_call.1} parent=1 // pred_check_branch
      %33 = sbr.rel (0) target = $region29
    $region28: #{tpu_custom_call.1} parent=1 // pred_region
      _
    $region29: #{tpu_custom_call.1} parent=1 // pred_fallthru
      _
    // Predicated region
    $region30: #{tpu_custom_call.1} parent=1 // pred_check
      _
    $region31: #{tpu_custom_call.1} parent=1 // pred_check_branch
      %35 = sbr.rel (0) target = $region33
    $region32: #{tpu_custom_call.1} parent=1 // pred_region
      _
    $region33: #{tpu_custom_call.1} parent=1 // pred_fallthru
      _
    // Predicated region
    $region34: #{tpu_custom_call.1} parent=1 // pred_check
      _
    $region35: #{tpu_custom_call.1} parent=1 // pred_check_branch
      %37 = sbr.rel (0) target = $region37
    $region36: #{tpu_custom_call.1} parent=1 // pred_region
      _
    $region37: #{tpu_custom_call.1} parent=1 // pred_fallthru
      _
    // Predicated region
    $region38: #{tpu_custom_call.1} parent=1 // pred_check
      _
    $region39: #{tpu_custom_call.1} parent=1 // pred_check_branch
      %39 = sbr.rel (0) target = $region41
    $region40: #{tpu_custom_call.1} parent=1 // pred_region
      _
    $region41: #{tpu_custom_call.1} parent=1 // pred_fallthru
      _
    // Predicated region
    $region42: #{tpu_custom_call.1} parent=1 // pred_check
      _
    $region43: #{tpu_custom_call.1} parent=1 // pred_check_branch
      %41 = sbr.rel (0) target = $region45
    $region44: #{tpu_custom_call.1} parent=1 // pred_region
      _
    $region45: #{tpu_custom_call.1} parent=1 // pred_fallthru
      _
    // Predicated region
    $region46: #{tpu_custom_call.1} parent=1 // pred_check
      _
    $region47: #{tpu_custom_call.1} parent=1 // pred_check_branch
      %43 = sbr.rel (0) target = $region49
    $region48: #{tpu_custom_call.1} parent=1 // pred_region
      _
    $region49: #{tpu_custom_call.1} parent=1 // pred_fallthru
      _
    // Predicated region
    $region50: #{tpu_custom_call.1} parent=1 // pred_check
      _
    $region51: #{tpu_custom_call.1} parent=1 // pred_check_branch
      %45 = sbr.rel (0) target = $region53
    $region52: #{tpu_custom_call.1} parent=1 // pred_region
      _
    $region53: #{tpu_custom_call.1} parent=1 // pred_fallthru
      _
    // Predicated region
    $region54: #{tpu_custom_call.1} parent=1 // pred_check
      _
    $region55: #{tpu_custom_call.1} parent=1 // pred_check_branch
      %47 = sbr.rel (0) target = $region57
    $region56: #{tpu_custom_call.1} parent=1 // pred_region
      _
    $region57: #{tpu_custom_call.1} parent=1 // pred_fallthru
      _
    %v48 = vld [vmem:[%s0] sm:$0xff]
    %v49 = vld [vmem:[%s1] sm:$0xff]
    %v50 = vld [vmem:[%s2] sm:$0x7]
    %v51 = vld [vmem:[%s3] sm:$0x1]
    %53 = vset.pattern.permute.xlu0 0
    %54 = vperm.xlu0 %53, %v48
    %v55 = vpop.permute.xlu0 %54
    %v57 = vperm.slane %v50, 0
    %v58 = vmul.f32 %v55, %v57
    %v60 = vperm.slane %v51, 0
    %v62 = vadd.f32 %v60, %v58
    %63 = vset.pattern.permute.xlu0 1
    %64 = vperm.xlu0 %63, %v48
    %v65 = vpop.permute.xlu0 %64
    %v67 = vperm.slane %v50, 1
    %v68 = vmul.f32 %v65, %v67
    %v69 = vadd.f32 %v62, %v68
    %70 = vset.pattern.permute.xlu0 2
    %71 = vperm.xlu0 %70, %v48
    %v72 = vpop.permute.xlu0 %71
    %v74 = vperm.slane %v50, 2
    %v75 = vmul.f32 %v72, %v74
    %v76 = vadd.f32 %v69, %v75
    %v77 = vmax.f32 %v76, 0.0
    %v78 = vld [vmem:[%s4] sm:$0xff]
    %v79 = vld [vmem:[%s4 + $0x8] sm:$0xff]
    %v80 = vld [vmem:[%s5] sm:$0x1]
    %v82 = vperm.slane %v80, 0
    %vm84 = vcmask 130048
    %v86 = vsel %vm84, %v77, 0
    %88 = vmatpush.msra.mxu0 0.0
    %89 = vmatpush.msra.mxu0 0.0
    %90 = vmatpush.msra.mxu0 0.0
    %91 = vmatpush.msra.mxu0 0.0
    %92 = vmatpush.msra.mxu0 0.0
    %93 = vmatpush.msra.mxu0 0.0
    %94 = vmatpush.msra.mxu0 0.0
    %95 = vmatpush.msra.mxu0 0.0
    %96 = vmatpush.msra.mxu0 0.0
    %97 = vmatpush.msra.mxu0 0.0
    %98 = vmatpush.msra.mxu0 0.0
    %99 = vmatpush.msra.mxu0 0.0
    %100 = vmatpush.msra.mxu0 0.0
    %101 = vmatpush.msra.mxu0 0.0
    %102 = vmatpush.msra.mxu0 %v79
    %103 = vmatpush.msra.mxu0 %v78
    %104 = vmatmul.f32.gmra.mxu0 %v86
    %v105 = vpop.f32.mrf.mxu0
    %v106 = vadd.f32 %v82, %v105
    %107 = vdwg.mxu0
    %v108 = vmax.f32 %v106, 0.0
    %v109 = vld [vmem:[%s6] sm:$0xff]
    %v110 = vld [vmem:[%s7] sm:$0x1]
    %v112 = vperm.slane %v110, 0
    %vm114 = vcmask 64512
    %v116 = vsel %vm114, %v108, 0
    %118 = vmatpush.msra.mxu0 0.0
    %119 = vmatpush.msra.mxu0 0.0
    %120 = vmatpush.msra.mxu0 0.0
    %121 = vmatpush.msra.mxu0 0.0
    %122 = vmatpush.msra.mxu0 0.0
    %123 = vmatpush.msra.mxu0 0.0
    %124 = vmatpush.msra.mxu0 0.0
    %125 = vmatpush.msra.mxu0 0.0
    %126 = vmatpush.msra.mxu0 0.0
    %127 = vmatpush.msra.mxu0 0.0
    %128 = vmatpush.msra.mxu0 0.0
    %129 = vmatpush.msra.mxu0 0.0
    %130 = vmatpush.msra.mxu0 0.0
    %131 = vmatpush.msra.mxu0 0.0
    %132 = vmatpush.msra.mxu0 0.0
    %133 = vmatpush.msra.mxu0 %v109
    %134 = vmatmul.f32.gmra.mxu0 %v116
    %v135 = vpop.f32.mrf.mxu0
    %v136 = vadd.f32 %v112, %v135
    %137 = vdwg.mxu0
    %v138 = vmul.f32 %v136, 0.5
    %v139 = vmul.f32 %v138, 1.442695
    %v140 = vpow.pop %v139
    %142 = vrot.lane.b32.xlu0 %v140, 125
    %v143 = vpop.permute.xlu0 %142
    %v145 = vmul.f32 %v49, %v143
    %v146 = vadd.f32 %v136, %v145
    %v147 = vld [vmem:[%s8] sm:$0x7]
    %v148 = vld [vmem:[%s9] sm:$0x1]
    %150 = vset.pattern.permute.xlu0 0
    %151 = vperm.xlu0 %150, %v146
    %v152 = vpop.permute.xlu0 %151
    %v154 = vperm.slane %v147, 0
    %v155 = vmul.f32 %v152, %v154
    %v157 = vperm.slane %v148, 0
    %v159 = vadd.f32 %v157, %v155
    %160 = vset.pattern.permute.xlu0 1
    %161 = vperm.xlu0 %160, %v146
    %v162 = vpop.permute.xlu0 %161
    %v164 = vperm.slane %v147, 1
    %v165 = vmul.f32 %v162, %v164
    %v166 = vadd.f32 %v159, %v165
    %167 = vset.pattern.permute.xlu0 2
    %168 = vperm.xlu0 %167, %v146
    %v169 = vpop.permute.xlu0 %168
    %v171 = vperm.slane %v147, 2
    %v172 = vmul.f32 %v169, %v171
    %v173 = vadd.f32 %v166, %v172
    %v174 = vmax.f32 %v173, 0.0
    %v175 = vld [vmem:[%s10] sm:$0xff]
    %v176 = vld [vmem:[%s11] sm:$0x1]
    %v178 = vperm.slane %v176, 0
    %v181 = vsel %vm114, %v174, 0
    %183 = vmatpush.msra.mxu0 0.0
    %184 = vmatpush.msra.mxu0 0.0
    %185 = vmatpush.msra.mxu0 0.0
    %186 = vmatpush.msra.mxu0 0.0
    %187 = vmatpush.msra.mxu0 0.0
    %188 = vmatpush.msra.mxu0 0.0
    %189 = vmatpush.msra.mxu0 0.0
    %190 = vmatpush.msra.mxu0 0.0
    %191 = vmatpush.msra.mxu0 0.0
    %192 = vmatpush.msra.mxu0 0.0
    %193 = vmatpush.msra.mxu0 0.0
    %194 = vmatpush.msra.mxu0 0.0
    %195 = vmatpush.msra.mxu0 0.0
    %196 = vmatpush.msra.mxu0 0.0
    %197 = vmatpush.msra.mxu0 0.0
    %198 = vmatpush.msra.mxu0 %v175
    %199 = vmatmul.f32.gmra.mxu0 %v181
    %v200 = vpop.f32.mrf.mxu0
    %v201 = vadd.f32 %v178, %v200
    %202 = vdwg.mxu0
    %v203 = vmax.f32 %v201, 0.0
    %v204 = vld [vmem:[%s12] sm:$0xff]
    %v205 = vld [vmem:[%s12 + $0x8] sm:$0xff]
    %v206 = vld [vmem:[%s13] sm:$0x1]
    %v208 = vperm.slane %v206, 0
    %v211 = vsel %vm84, %v203, 0
    %213 = vmatpush.msra.mxu0 0.0
    %214 = vmatpush.msra.mxu0 0.0
    %215 = vmatpush.msra.mxu0 0.0
    %216 = vmatpush.msra.mxu0 0.0
    %217 = vmatpush.msra.mxu0 0.0
    %218 = vmatpush.msra.mxu0 0.0
    %219 = vmatpush.msra.mxu0 0.0
    %220 = vmatpush.msra.mxu0 0.0
    %221 = vmatpush.msra.mxu0 0.0
    %222 = vmatpush.msra.mxu0 0.0
    %223 = vmatpush.msra.mxu0 0.0
    %224 = vmatpush.msra.mxu0 0.0
    %225 = vmatpush.msra.mxu0 0.0
    %226 = vmatpush.msra.mxu0 0.0
    %227 = vmatpush.msra.mxu0 %v205
    %228 = vmatpush.msra.mxu0 %v204
    %229 = vmatmul.f32.gmra.mxu0 %v211
    %v230 = vpop.f32.mrf.mxu0
    %v231 = vadd.f32 %v208, %v230
    %232 = vdwg.mxu0
    %234 = vrot.lane.b32.xlu0 %v136, 3
    %v235 = vpop.permute.xlu0 %234
    %vm237 = vcmask 23552
    %v238 = vsel %vm237, %v231, %v235
    %vm239 = vcmask 48128
    %v240 = vsel %vm239, %v238, %v235
    %vm241 = vcmask 72704
    %242 = vst.msk [vmem:[#allocation2] sm:$0xff] %vm241, %v240
    // Predicated region
    $region58: #{tpu_custom_call.1} parent=1 // pred_check
      _
    $region59: #{tpu_custom_call.1} parent=1 // pred_check_branch
      %244 = sbr.rel (0) target = $region61
    $region60: #{tpu_custom_call.1} parent=1 // pred_region
      %246 = vsyncadd [#allocation3], 0
      %s248 = sshll.u32 [#allocation2], 4
      %s249 = int_to_ptr.vmem [resolvable:$true] %s248
      %s250 = sshll.u32 %s14, 4
      %s251 = int_to_ptr.hbm [resolvable:$true] %s250
      %253 = dma.vmem_to_hbm [thread:$0]  %s249, 128, %s251, [#allocation3]
    $region61: #{tpu_custom_call.1} parent=1 // pred_fallthru
      _
    // Predicated region
    $region62: #{tpu_custom_call.1} parent=1 // pred_check
      _
    $region63: #{tpu_custom_call.1} parent=1 // pred_check_branch
      %255 = sbr.rel (0) target = $region65
    $region64: #{tpu_custom_call.1} parent=1 // pred_region
      %257 = dma.done [#allocation3], 128
    $region65: #{tpu_custom_call.1} parent=1 // pred_fallthru
      _
    %258 = vsyncpa [#allocation3], 1

</llo_original>
